<compile_context>
chip_gen: v5e
topology: v5e:2x2
jax: 0.10.0
libtpu: 0.0.40
codegen_flags: <defaults>
</compile_context>

<pallas_src>
import jax
import jax.numpy as jnp
from jax.experimental import pallas as pl
from jax.experimental.pallas import tpu as pltpu

_LANES = 128
# Packed rows per grid step: 8192 * 128 lanes * 4 B = 4 MiB per buffer
# (8 MiB double-buffered) -> fits default scoped VMEM on v5e/v6e/v7x while
# amortizing the ~0.35 us per-step pipeline overhead.
_MAX_TILE_ROWS = 8192


def _packed_dot_kernel(x_ref, w_ref, o_ref):
    # x_ref: (TILE_ROWS, pack*F) lane-dense batch tile
    # w_ref: (pack*F, pack)      block-diagonal weight (resident, tiny)
    # o_ref: (TILE_ROWS, pack)   out[r, g] = (x @ W.T)[r*pack + g, 0]
    o_ref[...] = jnp.dot(
        x_ref[...], w_ref[...], preferred_element_type=jnp.float32
    ).astype(o_ref.dtype)


@jax.jit
def lambda_penalty_forward(x, weight):
    """x: (batch, F) f32, weight: (1, F) f32 -> (batch, 1) f32 (== x @ W.T)."""
    batch, f = x.shape
    assert weight.shape == (1, f)

    # How many batch elements fit in one 128-lane row (4 for F=32).
    pack = _LANES // f if (f <= _LANES and _LANES % f == 0) else 1
    pk = pack * f

    # Pad only when batch is not a multiple of `pack` (no copy for batch=8).
    batch_p = pl.cdiv(batch, pack) * pack
    if batch_p != batch:
        x = jnp.pad(x, ((0, batch_p - batch), (0, 0)))
    rows = batch_p // pack

    # Free row-major view: each row packs `pack` consecutive batch elements.
    x_packed = x.reshape(rows, pk)

    # Block-diagonal weight (pk, pack): sel_w[g*F + i, g] = W[0, i], else 0.
    # Built once here (tiny, 128x4); contracted lane-dense on the MXU in-kernel.
    sel_w = jnp.kron(jnp.eye(pack, dtype=weight.dtype), weight.reshape(f, 1))

    if rows <= _MAX_TILE_ROWS:
        tile_rows = rows            # single step; block == full array (no (8,128) issue)
    else:
        tile_rows = _MAX_TILE_ROWS  # multiple of 8; ragged last block is masked by Pallas
    num_tiles = pl.cdiv(rows, tile_rows)

    out_packed = pl.pallas_call(
        _packed_dot_kernel,
        out_shape=jax.ShapeDtypeStruct((rows, pack), jnp.float32),
        grid_spec=pltpu.PrefetchScalarGridSpec(
            num_scalar_prefetch=0,
            grid=(num_tiles,),
            in_specs=[
                pl.BlockSpec((tile_rows, pk), lambda i: (i, 0)),  # x tile (lane-dense)
                pl.BlockSpec((pk, pack), lambda i: (0, 0)),       # weight (resident)
            ],
            out_specs=pl.BlockSpec((tile_rows, pack), lambda i: (i, 0)),
        ),
        compiler_params=pltpu.CompilerParams(
            # Lets v7x shard tiles across both TensorCores; measured no-op on v5e/v6e.
            dimension_semantics=("parallel",),
        ),
        cost_estimate=pl.CostEstimate(
            flops=2 * batch_p * f,
            bytes_accessed=batch_p * f * 4 + pk * pack * 4 + batch_p * 4,
            transcendentals=0,
        ),
    )(x_packed, sel_w)

    # (rows, pack) -> (batch, 1): free row-major views, batch order preserved.
    return out_packed.reshape(batch_p)[:batch][:, None]


if __name__ == "__main__":
    # Config (synthetic, matches module __init__ semantics):
    #   constraints_conditional_minkowski_encoding_type = None
    #   amount_constraints = 16  ->  in_features = amount_constraints * 2 = 32
    amount_constraints = 16
    in_features = amount_constraints * 2
    batch = 8

    key = jax.random.PRNGKey(0)
    kx, kw = jax.random.split(key)

    x = jax.random.normal(kx, (batch, in_features), dtype=jnp.float32)
    # Deterministic weight init mimicking torch.nn.Linear default
    # (uniform in [-1/sqrt(fan_in), 1/sqrt(fan_in)]).
    bound = 1.0 / (in_features ** 0.5)
    weight = jax.random.uniform(
        kw, (1, in_features), minval=-bound, maxval=bound, dtype=jnp.float32
    )

    out = lambda_penalty_forward(x, weight)
    jax.block_until_ready(out)

    # Correctness check against plain-JAX reference of the PyTorch forward.
    ref = x @ weight.T
    assert out.shape == (batch, 1)
    assert jnp.allclose(out, ref, atol=1e-5, rtol=1e-5)

    # TODO(synk): custom_step / update_function are optimizer-side ops
    # (projected gradient ascent on lambda), not part of forward; not kernelized.
    print("KERNEL_OK")
</pallas_src>

<mosaic_0001>
module attributes {stable_mosaic.version = 11 : i64} {
  func.func @_packed_dot_kernel(%arg0: i32, %arg1: memref<2x128xf32, #tpu.memory_space<vmem>>, %arg2: memref<128x4xf32, #tpu.memory_space<vmem>>, %arg3: memref<2x4xf32, #tpu.memory_space<vmem>>) attributes {dimension_semantics = [#tpu.dimension_semantics<parallel>], iteration_bounds = array<i64: 1>, scalar_prefetch = 0 : i64, scratch_operands = 0 : i64, tpu.core_type = #tpu.core_type<tc>, window_params = [{transform_indices = @transform_0, window_bounds = array<i64: 2, 128>}, {pipeline_mode = #tpu.pipeline_mode<synchronous>, transform_indices = @transform_1, window_bounds = array<i64: 128, 4>}, {transform_indices = @transform_2, window_bounds = array<i64: 2, 4>}]} {
    %c0 = arith.constant 0 : index
    %c0_0 = arith.constant 0 : index
    %0 = vector.load %arg1[%c0, %c0_0] : memref<2x128xf32, #tpu.memory_space<vmem>>, vector<2x128xf32>
    %c0_1 = arith.constant 0 : index
    %c0_2 = arith.constant 0 : index
    %1 = vector.load %arg2[%c0_1, %c0_2] : memref<128x4xf32, #tpu.memory_space<vmem>>, vector<128x4xf32>
    %cst = arith.constant dense<0.000000e+00> : vector<2x4xf32>
    %2 = tpu.matmul %0, %1, %cst {dimension_numbers = #tpu.dot_dimension_numbers<[1], [0], [0], [1], [0, 0, 1, 1], [], []>} : vector<2x128xf32>, vector<128x4xf32>, vector<2x4xf32> -> vector<2x4xf32>
    %c0_3 = arith.constant 0 : index
    %c0_4 = arith.constant 0 : index
    %3 = vector.load %arg3[%c0_3, %c0_4] : memref<2x4xf32, #tpu.memory_space<vmem>>, vector<2x4xf32>
    tpu.vector_store %arg3[%c0_3, %c0_4], %2 {strides = array<i32>} : memref<2x4xf32, #tpu.memory_space<vmem>>, vector<2x4xf32>,
    return
  }
  func.func @transform_0(%arg0: i32) -> (i32, i32) {
    %c0_i32 = arith.constant 0 : i32
    %c0_i32_0 = arith.constant 0 : i32
    return %arg0, %c0_i32 : i32, i32
  }
  func.func @transform_1(%arg0: i32) -> (i32, i32) {
    %c0_i32 = arith.constant 0 : i32
    %c0_i32_0 = arith.constant 0 : i32
    %c0_i32_1 = arith.constant 0 : i32
    return %c0_i32, %c0_i32_0 : i32, i32
  }
  func.func @transform_2(%arg0: i32) -> (i32, i32) {
    %c0_i32 = arith.constant 0 : i32
    %c0_i32_0 = arith.constant 0 : i32
    return %arg0, %c0_i32 : i32, i32
  }
}

</mosaic_0001>

<llo_original>
// kernel: lambda_penalty_forward.1
$region0: #{lambda_penalty_forward.1}
  #allocation0 [shape = 'u32[]', space=smem, size = 0x4, offset = 0x4, fixed_abs, tag = 'smem constant byte address 0x4 - core index']
  #allocation1 [shape = 'u32[72,128]{1,0:T(1,128)}', space=vmem, size = 0x9000, scoped, tag = 'internal scratch']
  %s0 = inlined_call_operand.vmem [shape: f32[2,128], index: 0, kind: input, shape index: {}]
  %s1 = inlined_call_operand.vmem [shape: f32[128,4], index: 1, kind: input, shape index: {}]
  %s2 = inlined_call_operand.vmem [shape: f32[2,4], index: 2, kind: output, shape index: {}]
  %s3 = sld [smem:[#allocation0]]
  $region18: #{lambda_penalty_forward.1} parent=0
    _
  %s5 = ssub.s32 1, %s3
  %s6 = scalar_select 0, %s5, %s3
  // Predicated region
  $region2: #{lambda_penalty_forward.1} parent=0 // pred_check
    _
  $region3: #{lambda_penalty_forward.1} parent=0 // pred_check_branch
    %8 = sbr.rel (0) target = $region5
  $region4: #{lambda_penalty_forward.1} parent=0 // pred_region
    _
  $region5: #{lambda_penalty_forward.1} parent=0 // pred_fallthru
    _
  // Predicated region
  $region6: #{lambda_penalty_forward.1} parent=0 // pred_check
    _
  $region7: #{lambda_penalty_forward.1} parent=0 // pred_check_branch
    %10 = sbr.rel (0) target = $region9
  $region8: #{lambda_penalty_forward.1} parent=0 // pred_region
    _
  $region9: #{lambda_penalty_forward.1} parent=0 // pred_fallthru
    _
  %v11 = vld [vmem:[%s0] sm:$0x3]
  %v12 = vld [vmem:[%s1] sm:$0xff]
  %v13 = vld [vmem:[%s1 + $0x8] sm:$0xff]
  %v14 = vld [vmem:[%s1 + $0x10] sm:$0xff]
  %v15 = vld [vmem:[%s1 + $0x18] sm:$0xff]
  %v16 = vld [vmem:[%s1 + $0x20] sm:$0xff]
  %v17 = vld [vmem:[%s1 + $0x28] sm:$0xff]
  %v18 = vld [vmem:[%s1 + $0x30] sm:$0xff]
  %v19 = vld [vmem:[%s1 + $0x38] sm:$0xff]
  %v20 = vld [vmem:[%s1 + $0x40] sm:$0xff]
  %v21 = vld [vmem:[%s1 + $0x48] sm:$0xff]
  %v22 = vld [vmem:[%s1 + $0x50] sm:$0xff]
  %v23 = vld [vmem:[%s1 + $0x58] sm:$0xff]
  %v24 = vld [vmem:[%s1 + $0x60] sm:$0xff]
  %v25 = vld [vmem:[%s1 + $0x68] sm:$0xff]
  %v26 = vld [vmem:[%s1 + $0x70] sm:$0xff]
  %v27 = vld [vmem:[%s1 + $0x78] sm:$0xff]
  %28 = vmatpush.msra.mxu0 %v27
  %29 = vmatpush.msra.mxu0 %v26
  %30 = vmatpush.msra.mxu0 %v25
  %31 = vmatpush.msra.mxu0 %v24
  %32 = vmatpush.msra.mxu0 %v23
  %33 = vmatpush.msra.mxu0 %v22
  %34 = vmatpush.msra.mxu0 %v21
  %35 = vmatpush.msra.mxu0 %v20
  %36 = vmatpush.msra.mxu0 %v19
  %37 = vmatpush.msra.mxu0 %v18
  %38 = vmatpush.msra.mxu0 %v17
  %39 = vmatpush.msra.mxu0 %v16
  %40 = vmatpush.msra.mxu0 %v15
  %41 = vmatpush.msra.mxu0 %v14
  %42 = vmatpush.msra.mxu0 %v13
  %43 = vmatpush.msra.mxu0 %v12
  %44 = vmatmul.f32.gmra.mxu0 %v11
  %v45 = vpop.f32.mrf.mxu0
  %v46 = vadd.f32 0.0, %v45
  %47 = vdwg.mxu0
  %vm48 = vcmask 25600
  %49 = vst.msk [vmem:[%s2] sm:$0x3] %vm48, %v46
  // Predicated region
  $region10: #{lambda_penalty_forward.1} parent=0 // pred_check
    _
  $region11: #{lambda_penalty_forward.1} parent=0 // pred_check_branch
    %51 = sbr.rel (0) target = $region13
  $region12: #{lambda_penalty_forward.1} parent=0 // pred_region
    _
  $region13: #{lambda_penalty_forward.1} parent=0 // pred_fallthru
    _
  // Predicated region
  $region14: #{lambda_penalty_forward.1} parent=0 // pred_check
    _
  $region15: #{lambda_penalty_forward.1} parent=0 // pred_check_branch
    %53 = sbr.rel (0) target = $region17
  $region16: #{lambda_penalty_forward.1} parent=0 // pred_region
    _
  $region17: #{lambda_penalty_forward.1} parent=0 // pred_fallthru
    _

</llo_original>
